<compile_context>
chip_gen: v5e
topology: v5e:2x2
jax: 0.10.0
libtpu: 0.0.40
codegen_flags: <defaults>
</compile_context>

<pallas_src>
import jax
import jax.numpy as jnp
from jax.experimental import pallas as pl
from jax.experimental.pallas import tpu as pltpu

LANE = 128


def _round_up(x, m):
    return ((x + m - 1) // m) * m


def _han_kernel(a_o_ref, a_g_ref, xw_o_ref, xw_g_ref, b_ref, out_ref, acc_ref):
    """One (row-tile, K-tile) step: two MXU matmuls accumulated into f32 scratch."""
    k = pl.program_id(1)

    @pl.when(k == 0)
    def _():
        acc_ref[...] = jnp.zeros_like(acc_ref)

    acc_ref[...] += jnp.dot(a_o_ref[...], xw_o_ref[...],
                            preferred_element_type=jnp.float32)
    acc_ref[...] += jnp.dot(a_g_ref[...], xw_g_ref[...],
                            preferred_element_type=jnp.float32)

    @pl.when(k == pl.num_programs(1) - 1)
    def _():
        out_ref[...] = (acc_ref[...] + b_ref[...]).astype(out_ref.dtype)


def han_layer_forward(a_orders, a_geo, h_user, params, *, tile_m=128, tile_k=512,
                      compute_dtype=jnp.bfloat16):
    """Returns {'user': sum of the two meta-path GraphConv outputs}."""
    N, Fin = h_user.shape
    Fout = params["w_orders"].shape[1]

    tile_m = min(tile_m, N)
    tile_k = min(tile_k, N)
    assert N % tile_m == 0 and tile_m % 8 == 0
    assert N % tile_k == 0 and (tile_k % LANE == 0 or tile_k == N)

    # Adjacencies stream directly into the kernel. Cast only if the caller did not already
    # provide them in the MXU compute dtype (ideally cached upstream in bf16).
    a_o = a_orders if a_orders.dtype == compute_dtype else a_orders.astype(compute_dtype)
    a_g = a_geo if a_geo.dtype == compute_dtype else a_geo.astype(compute_dtype)

    # Hoisted X@W projections (tiny [N,Fin]@[Fin,Fout] matmuls, done once per call).
    xw_o = jnp.dot(h_user, params["w_orders"], preferred_element_type=jnp.float32)
    xw_g = jnp.dot(h_user, params["w_geo"], preferred_element_type=jnp.float32)
    b_sum = params["b_orders"] + params["b_geo"]               # [1, Fout], folded biases

    # Lane-dense output/RHS: pad Fout to a multiple of 128 lanes (unmasked vst); the only
    # post-call work is the un-pad slice.
    fout_pad = _round_up(Fout, LANE)
    pad = ((0, 0), (0, fout_pad - Fout))
    xw_o = jnp.pad(xw_o, pad).astype(compute_dtype)            # [N, fout_pad] bf16
    xw_g = jnp.pad(xw_g, pad).astype(compute_dtype)
    b_sum = jnp.pad(b_sum, pad).astype(jnp.float32)            # [1, fout_pad] f32

    grid = (N // tile_m, N // tile_k)                           # rows parallel, K last

    out = pl.pallas_call(
        _han_kernel,
        # Final dtype written straight from the kernel (no post-call astype pass).
        out_shape=jax.ShapeDtypeStruct((N, fout_pad), h_user.dtype),
        grid_spec=pltpu.PrefetchScalarGridSpec(
            num_scalar_prefetch=0,
            grid=grid,
            in_specs=[
                pl.BlockSpec((tile_m, tile_k), lambda i, k: (i, k)),     # A_orders row tile
                pl.BlockSpec((tile_m, tile_k), lambda i, k: (i, k)),     # A_geo row tile
                pl.BlockSpec((tile_k, fout_pad), lambda i, k: (k, 0)),   # XW_orders K tile
                pl.BlockSpec((tile_k, fout_pad), lambda i, k: (k, 0)),   # XW_geo K tile
                pl.BlockSpec((1, fout_pad), lambda i, k: (0, 0)),        # folded bias (tiny)
            ],
            out_specs=pl.BlockSpec((tile_m, fout_pad), lambda i, k: (i, 0)),
            scratch_shapes=[pltpu.VMEM((tile_m, fout_pad), jnp.float32)],
        ),
        # K-tiling keeps the VMEM footprint flat (<~1.5 MiB at the defaults), so the scoped
        # VMEM default is fine on every generation; no vmem_limit_bytes bump needed.
        compiler_params=pltpu.CompilerParams(
            dimension_semantics=("parallel", "arbitrary")),
    )(a_o, a_g, xw_o, xw_g, b_sum)

    return {"user": out[:, :Fout]}


def _normalize_adj(a):
    """DGL GraphConv norm='both':  D_dst^{-1/2} A D_src^{-1/2} (glue, plain JAX)."""
    deg_out = jnp.clip(a.sum(axis=0), 1.0, None)  # src degrees
    deg_in = jnp.clip(a.sum(axis=1), 1.0, None)   # dst degrees
    return (deg_in[:, None] ** -0.5) * a * (deg_out[None, :] ** -0.5)


if __name__ == "__main__":
    key = jax.random.PRNGKey(0)
    N, IN_DIM, OUT_DIM = 256, 16, 16   # N=256 -> 2 parallel row tiles of 128, 1 K tile

    k_h, k_ao, k_ag, k_wo, k_wg, k_bo, k_bg = jax.random.split(key, 7)

    # node features for source type 'user'
    h_user = jax.random.normal(k_h, (N, IN_DIM), dtype=jnp.float32)

    # dense random meta-path graphs (self-loops added), then 'both' normalization
    a_orders_f32 = _normalize_adj(
        (jax.random.uniform(k_ao, (N, N)) < 0.15).astype(jnp.float32) + jnp.eye(N))
    a_geo_f32 = _normalize_adj(
        (jax.random.uniform(k_ag, (N, N)) < 0.15).astype(jnp.float32) + jnp.eye(N))
    # Cache the normalized adjacencies in bf16 upstream so the kernel call does no cast pass.
    a_orders = a_orders_f32.astype(jnp.bfloat16)
    a_geo = a_geo_f32.astype(jnp.bfloat16)

    # deterministic GraphConv parameters (one conv per target key, as in ModuleDict)
    params = {
        "w_orders": jax.random.normal(k_wo, (IN_DIM, OUT_DIM), jnp.float32) * 0.1,
        "w_geo":    jax.random.normal(k_wg, (IN_DIM, OUT_DIM), jnp.float32) * 0.1,
        "b_orders": jax.random.normal(k_bo, (1, OUT_DIM), jnp.float32) * 0.1,
        "b_geo":    jax.random.normal(k_bg, (1, OUT_DIM), jnp.float32) * 0.1,
    }
    # TODO(synk): self.attn (Linear(out_dim, 1) per meta-path) is unused in forward(); omitted.

    h_new = han_layer_forward(a_orders, a_geo, h_user, params)
    out = jax.block_until_ready(h_new["user"])

    # pure-JAX f32 reference of the same forward (loose tolerance: bf16 matmul operands)
    ref = (a_orders_f32 @ (h_user @ params["w_orders"]) + params["b_orders"]
           + a_geo_f32 @ (h_user @ params["w_geo"]) + params["b_geo"])
    assert out.shape == (N, OUT_DIM)
    assert out.dtype == h_user.dtype
    assert jnp.allclose(out.astype(jnp.float32), ref, atol=1e-2, rtol=1e-2), \
        float(jnp.abs(out.astype(jnp.float32) - ref).max())

    print("KERNEL_OK")
</pallas_src>

<mosaic_0001>
module attributes {stable_mosaic.version = 11 : i64} {
  func.func @_han_kernel(%arg0: i32, %arg1: i32, %arg2: memref<128x256xbf16, #tpu.memory_space<vmem>>, %arg3: memref<128x256xbf16, #tpu.memory_space<vmem>>, %arg4: memref<256x128xbf16, #tpu.memory_space<vmem>>, %arg5: memref<256x128xbf16, #tpu.memory_space<vmem>>, %arg6: memref<1x128xf32, #tpu.memory_space<vmem>>, %arg7: memref<128x128xf32, #tpu.memory_space<vmem>>, %arg8: memref<128x128xf32, #tpu.memory_space<vmem>>) attributes {dimension_semantics = [#tpu.dimension_semantics<parallel>, #tpu.dimension_semantics<arbitrary>], iteration_bounds = array<i64: 2, 1>, scalar_prefetch = 0 : i64, scratch_operands = 1 : i64, tpu.core_type = #tpu.core_type<tc>, window_params = [{transform_indices = @transform_0, window_bounds = array<i64: 128, 256>}, {transform_indices = @transform_1, window_bounds = array<i64: 128, 256>}, {transform_indices = @transform_2, window_bounds = array<i64: 256, 128>}, {transform_indices = @transform_3, window_bounds = array<i64: 256, 128>}, {pipeline_mode = #tpu.pipeline_mode<synchronous>, transform_indices = @transform_4, window_bounds = array<i64: 1, 128>}, {transform_indices = @transform_5, window_bounds = array<i64: 128, 128>}]} {
    %c0_i32 = arith.constant 0 : i32
    %0 = arith.cmpi eq, %arg1, %c0_i32 : i32
    %1 = arith.extui %0 : i1 to i32
    %c0_i32_0 = arith.constant 0 : i32
    %2 = arith.cmpi ne, %1, %c0_i32_0 : i32
    scf.if %2 {
      %cst_19 = arith.constant 0.000000e+00 : f32
      %18 = vector.broadcast %cst_19 : f32 to vector<128x128xf32>
      %c0_20 = arith.constant 0 : index
      %c0_21 = arith.constant 0 : index
      %19 = vector.load %arg8[%c0_20, %c0_21] : memref<128x128xf32, #tpu.memory_space<vmem>>, vector<128x128xf32>
      tpu.vector_store %arg8[%c0_20, %c0_21], %18 {strides = array<i32>} : memref<128x128xf32, #tpu.memory_space<vmem>>, vector<128x128xf32>,
    } else {
    }
    %c0 = arith.constant 0 : index
    %c0_1 = arith.constant 0 : index
    %3 = vector.load %arg8[%c0, %c0_1] : memref<128x128xf32, #tpu.memory_space<vmem>>, vector<128x128xf32>
    %c0_2 = arith.constant 0 : index
    %c0_3 = arith.constant 0 : index
    %4 = vector.load %arg2[%c0_2, %c0_3] : memref<128x256xbf16, #tpu.memory_space<vmem>>, vector<128x256xbf16>
    %c0_4 = arith.constant 0 : index
    %c0_5 = arith.constant 0 : index
    %5 = vector.load %arg4[%c0_4, %c0_5] : memref<256x128xbf16, #tpu.memory_space<vmem>>, vector<256x128xbf16>
    %cst = arith.constant dense<0.000000e+00> : vector<128x128xf32>
    %6 = tpu.matmul %4, %5, %cst {dimension_numbers = #tpu.dot_dimension_numbers<[1], [0], [0], [1], [0, 0, 1, 1], [], []>} : vector<128x256xbf16>, vector<256x128xbf16>, vector<128x128xf32> -> vector<128x128xf32>
    %7 = arith.addf %3, %6 : vector<128x128xf32>
    %c0_6 = arith.constant 0 : index
    %c0_7 = arith.constant 0 : index
    %8 = vector.load %arg8[%c0_6, %c0_7] : memref<128x128xf32, #tpu.memory_space<vmem>>, vector<128x128xf32>
    tpu.vector_store %arg8[%c0_6, %c0_7], %7 {strides = array<i32>} : memref<128x128xf32, #tpu.memory_space<vmem>>, vector<128x128xf32>,
    %c0_8 = arith.constant 0 : index
    %c0_9 = arith.constant 0 : index
    %9 = vector.load %arg8[%c0_8, %c0_9] : memref<128x128xf32, #tpu.memory_space<vmem>>, vector<128x128xf32>
    %c0_10 = arith.constant 0 : index
    %c0_11 = arith.constant 0 : index
    %10 = vector.load %arg3[%c0_10, %c0_11] : memref<128x256xbf16, #tpu.memory_space<vmem>>, vector<128x256xbf16>
    %c0_12 = arith.constant 0 : index
    %c0_13 = arith.constant 0 : index
    %11 = vector.load %arg5[%c0_12, %c0_13] : memref<256x128xbf16, #tpu.memory_space<vmem>>, vector<256x128xbf16>
    %cst_14 = arith.constant dense<0.000000e+00> : vector<128x128xf32>
    %12 = tpu.matmul %10, %11, %cst_14 {dimension_numbers = #tpu.dot_dimension_numbers<[1], [0], [0], [1], [0, 0, 1, 1], [], []>} : vector<128x256xbf16>, vector<256x128xbf16>, vector<128x128xf32> -> vector<128x128xf32>
    %13 = arith.addf %9, %12 : vector<128x128xf32>
    %c0_15 = arith.constant 0 : index
    %c0_16 = arith.constant 0 : index
    %14 = vector.load %arg8[%c0_15, %c0_16] : memref<128x128xf32, #tpu.memory_space<vmem>>, vector<128x128xf32>
    tpu.vector_store %arg8[%c0_15, %c0_16], %13 {strides = array<i32>} : memref<128x128xf32, #tpu.memory_space<vmem>>, vector<128x128xf32>,
    %c0_i32_17 = arith.constant 0 : i32
    %15 = arith.cmpi eq, %arg1, %c0_i32_17 : i32
    %16 = arith.extui %15 : i1 to i32
    %c0_i32_18 = arith.constant 0 : i32
    %17 = arith.cmpi ne, %16, %c0_i32_18 : i32
    scf.if %17 {
      %c0_19 = arith.constant 0 : index
      %c0_20 = arith.constant 0 : index
      %18 = vector.load %arg8[%c0_19, %c0_20] : memref<128x128xf32, #tpu.memory_space<vmem>>, vector<128x128xf32>
      %c0_21 = arith.constant 0 : index
      %c0_22 = arith.constant 0 : index
      %19 = vector.load %arg6[%c0_21, %c0_22] : memref<1x128xf32, #tpu.memory_space<vmem>>, vector<1x128xf32>
      %20 = vector.broadcast %19 : vector<1x128xf32> to vector<128x128xf32>
      %21 = arith.addf %18, %20 : vector<128x128xf32>
      %c0_23 = arith.constant 0 : index
      %c0_24 = arith.constant 0 : index
      %22 = vector.load %arg7[%c0_23, %c0_24] : memref<128x128xf32, #tpu.memory_space<vmem>>, vector<128x128xf32>
      tpu.vector_store %arg7[%c0_23, %c0_24], %21 {strides = array<i32>} : memref<128x128xf32, #tpu.memory_space<vmem>>, vector<128x128xf32>,
    } else {
    }
    return
  }
  func.func @transform_0(%arg0: i32, %arg1: i32) -> (i32, i32) {
    %c0_i32 = arith.constant 0 : i32
    return %arg0, %arg1 : i32, i32
  }
  func.func @transform_1(%arg0: i32, %arg1: i32) -> (i32, i32) {
    %c0_i32 = arith.constant 0 : i32
    return %arg0, %arg1 : i32, i32
  }
  func.func @transform_2(%arg0: i32, %arg1: i32) -> (i32, i32) {
    %c0_i32 = arith.constant 0 : i32
    %c0_i32_0 = arith.constant 0 : i32
    return %arg1, %c0_i32 : i32, i32
  }
  func.func @transform_3(%arg0: i32, %arg1: i32) -> (i32, i32) {
    %c0_i32 = arith.constant 0 : i32
    %c0_i32_0 = arith.constant 0 : i32
    return %arg1, %c0_i32 : i32, i32
  }
  func.func @transform_4(%arg0: i32, %arg1: i32) -> (i32, i32) {
    %c0_i32 = arith.constant 0 : i32
    %c0_i32_0 = arith.constant 0 : i32
    %c0_i32_1 = arith.constant 0 : i32
    return %c0_i32, %c0_i32_0 : i32, i32
  }
  func.func @transform_5(%arg0: i32, %arg1: i32) -> (i32, i32) {
    %c0_i32 = arith.constant 0 : i32
    %c0_i32_0 = arith.constant 0 : i32
    return %arg0, %c0_i32 : i32, i32
  }
}

</mosaic_0001>

<llo_original>
// kernel: tpu_custom_call.1
$region0: #{tpu_custom_call.1}
  #allocation0 [shape = 'u32[]', space=smem, size = 0x4, offset = 0x4, fixed_abs, tag = 'smem constant byte address 0x4 - core index']
  #allocation1 [shape = 'u32[72,128]{1,0:T(1,128)}', space=vmem, size = 0x9000, scoped, tag = 'internal scratch']
  #allocation2 [shape = 'f32[128,128]{1,0:T(8,128)}', space=vmem, size = 0x10000, scoped, tag = 'scratch operand']
  %s0 = inlined_call_operand.hbm [shape: bf16[256,256], index: 0, kind: input, shape index: {}]
  %s1 = inlined_call_operand.hbm [shape: bf16[256,256], index: 1, kind: input, shape index: {}]
  %s2 = inlined_call_operand.hbm [shape: bf16[256,128], index: 2, kind: input, shape index: {}]
  %s3 = inlined_call_operand.hbm [shape: bf16[256,128], index: 3, kind: input, shape index: {}]
  %s4 = inlined_call_operand.vmem [shape: f32[1,128], index: 4, kind: input, shape index: {}]
  %s5 = inlined_call_operand.hbm [shape: f32[256,128], index: 5, kind: output, shape index: {}]
  %s6 = sld [smem:[#allocation0]]
  $region77: #{tpu_custom_call.1} parent=0
    _
  %s8 = ssub.s32 1, %s6
  %s9 = scalar_select 0, %s8, %s6
  $region1: #{tpu_custom_call.1} parent=0
    #allocation3 [shape = 'u8[131072]{0}', space=vmem, size = 0x20000, scoped, tag = 'input window, operand 0']
    #allocation4 [shape = 's32[2]{0}', space=sflag, size = 0x8, scoped, tag = 'scoped memory for tpu_custom_call.1']
    #allocation5 [shape = 's32[2]{0}', space=sflag, size = 0x8, scoped, tag = 'scoped memory for tpu_custom_call.1']
    #allocation6 [shape = 'u8[131072]{0}', space=vmem, size = 0x20000, scoped, tag = 'input window, operand 1']
    #allocation7 [shape = 's32[2]{0}', space=sflag, size = 0x8, scoped, tag = 'scoped memory for tpu_custom_call.1']
    #allocation8 [shape = 'u8[65536]{0}', space=vmem, size = 0x10000, scoped, tag = 'input window, operand 2, single buffered']
    #allocation9 [shape = 'u8[65536]{0}', space=vmem, size = 0x10000, scoped, tag = 'input window, operand 3, single buffered']
    #allocation10 [shape = 's32[1]{0}', space=sflag, size = 0x4, scoped, tag = 'scoped memory for tpu_custom_call.1']
    #allocation11 [shape = 'u8[131072]{0}', space=vmem, size = 0x20000, scoped, tag = 'output window, operand 0']
    %10 = vsyncpa [#allocation4], 0
    %s11 = scalar_lea.sflag [#allocation4], 1
    %12 = vsyncpa %s11, 0
    %13 = vsyncpa [#allocation7], 0
    %s14 = scalar_lea.sflag [#allocation7], 1
    %15 = vsyncpa %s14, 0
    %16 = vsyncpa [#allocation10], 0
    %17 = vsyncpa [#allocation5], 0
    %s18 = scalar_lea.sflag [#allocation5], 1
    %19 = vsyncpa %s18, 0
    loop: start=0, step=1, limit=4
    $region2: #{tpu_custom_call.1} parent=1 // loop_pre_header
      _
    $region3: #{tpu_custom_call.1} parent=1 // loop_header
      %s21 = sphi 0, %s25
      %p22 = scmp.ge.s32.totalorder %s21, 4
      %s28 = sphi 0, %s40
      %s29 = sphi 0, %s36
      %s30 = sphi 0, %s28
      %s31 = sphi 0, %s29
      %s32 = sphi 0, %s30
      %s33 = sphi 0, %s31
      %s45 = sphi 0, %s47
      %s48 = sphi 0, %s45
      %s49 = sphi 0, %s48
      %s65 = sphi 0, %s49
      %s73 = sphi 0, %s75
      %s76 = sphi 0, %s73
      %s77 = sphi 0, %s76
      %s93 = sphi 0, %s77
      %s99 = sphi 0, %s101
      %s102 = sphi 0, %s99
      %s103 = sphi 0, %s102
      %s119 = sphi 0, %s103
      %s125 = sphi 0, %s127
      %s128 = sphi 0, %s125
      %s129 = sphi 0, %s128
      %s145 = sphi 0, %s129
      %s149 = sphi 0, %s149
      %s151 = sphi 0, %s149
      %s152 = sphi 0, %s151
      %s166 = sphi 0, %s152
      %s172 = sphi 0, %s174
      %s175 = sphi 0, %s172
      %s176 = sphi 0, %s175
      %s192 = sphi 0, %s176
    $region4: #{tpu_custom_call.1} parent=1 // loop_header_branch
      %24 = sbr.rel (%p22) target = $region8
    $region5: #{tpu_custom_call.1} parent=1 // loop_body
      %s26 = ssub.s32 %s21, 1
      %s27 = ssub.s32 %s21, 2
      %s34 = sadd.s32 1, %s29
      %p35 = scmp.ge.s32.totalorder %s34, 1
      %s36 = scalar_select %p35, 0, %s34
      %s37 = sadd.s32 1, %s28
      %s38 = scalar_select %p35, %s37, %s28
      %p39 = scmp.ge.s32.totalorder %s38, 2
      %s40 = scalar_select %p39, 0, %s38
      %s41 = ssub.s32 %s28, %s40
      %s42 = ssub.s32 %s29, %s36
      %s43 = sor.u32 %s41, %s42
      %p44 = scmp.eq.s32.totalorder %s43, 0
      %s46 = sadd.s32 %s45, 1
      %s47 = scalar_select %p44, %s45, %s46
      %p50 = pneg %p44
      %p51 = scmp.eq.s32.totalorder %s21, 1
      %p52 = por %p50, %p51
      %p53 = scmp.ne.s32.totalorder %s45, %s48
      %p54 = scmp.eq.s32.totalorder %s21, 0
      %p55 = por %p53, %p54
      %p56 = scmp.ne.s32.totalorder %s45, %s48
      %p57 = scmp.eq.s32.totalorder %s26, 1
      %p58 = por %p56, %p57
      %p59 = scmp.ne.s32.totalorder %s48, %s49
      %p60 = scmp.eq.s32.totalorder %s26, 0
      %p61 = por %p59, %p60
      %p62 = scmp.ne.s32.totalorder %s48, %s49
      %p63 = scmp.eq.s32.totalorder %s27, 1
      %p64 = por %p62, %p63
      %p66 = scmp.ne.s32.totalorder %s49, %s65
      %p67 = scmp.eq.s32.totalorder %s27, 0
      %p68 = por %p66, %p67
      %s69 = ssub.s32 %s28, %s40
      %s70 = ssub.s32 %s29, %s36
      %s71 = sor.u32 %s69, %s70
      %p72 = scmp.eq.s32.totalorder %s71, 0
      %s74 = sadd.s32 %s73, 1
      %s75 = scalar_select %p72, %s73, %s74
      %p78 = pneg %p72
      %p79 = scmp.eq.s32.totalorder %s21, 1
      %p80 = por %p78, %p79
      %p81 = scmp.ne.s32.totalorder %s73, %s76
      %p82 = scmp.eq.s32.totalorder %s21, 0
      %p83 = por %p81, %p82
      %p84 = scmp.ne.s32.totalorder %s73, %s76
      %p85 = scmp.eq.s32.totalorder %s26, 1
      %p86 = por %p84, %p85
      %p87 = scmp.ne.s32.totalorder %s76, %s77
      %p88 = scmp.eq.s32.totalorder %s26, 0
      %p89 = por %p87, %p88
      %p90 = scmp.ne.s32.totalorder %s76, %s77
      %p91 = scmp.eq.s32.totalorder %s27, 1
      %p92 = por %p90, %p91
      %p94 = scmp.ne.s32.totalorder %s77, %s93
      %p95 = scmp.eq.s32.totalorder %s27, 0
      %p96 = por %p94, %p95
      %s97 = ssub.s32 %s29, %s36
      %p98 = scmp.eq.s32.totalorder %s97, 0
      %s100 = sadd.s32 %s99, 1
      %s101 = scalar_select %p98, %s99, %s100
      %p104 = pneg %p98
      %p105 = scmp.eq.s32.totalorder %s21, 1
      %p106 = por %p104, %p105
      %p107 = scmp.ne.s32.totalorder %s99, %s102
      %p108 = scmp.eq.s32.totalorder %s21, 0
      %p109 = por %p107, %p108
      %p110 = scmp.ne.s32.totalorder %s99, %s102
      %p111 = scmp.eq.s32.totalorder %s26, 1
      %p112 = por %p110, %p111
      %p113 = scmp.ne.s32.totalorder %s102, %s103
      %p114 = scmp.eq.s32.totalorder %s26, 0
      %p115 = por %p113, %p114
      %p116 = scmp.ne.s32.totalorder %s102, %s103
      %p117 = scmp.eq.s32.totalorder %s27, 1
      %p118 = por %p116, %p117
      %p120 = scmp.ne.s32.totalorder %s103, %s119
      %p121 = scmp.eq.s32.totalorder %s27, 0
      %p122 = por %p120, %p121
      %s123 = ssub.s32 %s29, %s36
      %p124 = scmp.eq.s32.totalorder %s123, 0
      %s126 = sadd.s32 %s125, 1
      %s127 = scalar_select %p124, %s125, %s126
      %p130 = pneg %p124
      %p131 = scmp.eq.s32.totalorder %s21, 1
      %p132 = por %p130, %p131
      %p133 = scmp.ne.s32.totalorder %s125, %s128
      %p134 = scmp.eq.s32.totalorder %s21, 0
      %p135 = por %p133, %p134
      %p136 = scmp.ne.s32.totalorder %s125, %s128
      %p137 = scmp.eq.s32.totalorder %s26, 1
      %p138 = por %p136, %p137
      %p139 = scmp.ne.s32.totalorder %s128, %s129
      %p140 = scmp.eq.s32.totalorder %s26, 0
      %p141 = por %p139, %p140
      %p142 = scmp.ne.s32.totalorder %s128, %s129
      %p143 = scmp.eq.s32.totalorder %s27, 1
      %p144 = por %p142, %p143
      %p146 = scmp.ne.s32.totalorder %s129, %s145
      %p147 = scmp.eq.s32.totalorder %s27, 0
      %p148 = por %p146, %p147
      %s150 = sadd.s32 %s149, 1
      %p153 = scmp.eq.s32.totalorder %s21, 1
      %p154 = scmp.ne.s32.totalorder %s149, %s151
      %p155 = scmp.eq.s32.totalorder %s21, 0
      %p156 = por %p154, %p155
      %p157 = scmp.ne.s32.totalorder %s149, %s151
      %p158 = scmp.eq.s32.totalorder %s26, 1
      %p159 = por %p157, %p158
      %p160 = scmp.ne.s32.totalorder %s151, %s152
      %p161 = scmp.eq.s32.totalorder %s26, 0
      %p162 = por %p160, %p161
      %p163 = scmp.ne.s32.totalorder %s151, %s152
      %p164 = scmp.eq.s32.totalorder %s27, 1
      %p165 = por %p163, %p164
      %p167 = scmp.ne.s32.totalorder %s152, %s166
      %p168 = scmp.eq.s32.totalorder %s27, 0
      %p169 = por %p167, %p168
      %s170 = ssub.s32 %s28, %s40
      %p171 = scmp.eq.s32.totalorder %s170, 0
      %s173 = sadd.s32 %s172, 1
      %s174 = scalar_select %p171, %s172, %s173
      %p177 = pneg %p171
      %p178 = scmp.eq.s32.totalorder %s21, 1
      %p179 = por %p177, %p178
      %p180 = scmp.ne.s32.totalorder %s172, %s175
      %p181 = scmp.eq.s32.totalorder %s21, 0
      %p182 = por %p180, %p181
      %p183 = scmp.ne.s32.totalorder %s172, %s175
      %p184 = scmp.eq.s32.totalorder %s26, 1
      %p185 = por %p183, %p184
      %p186 = scmp.ne.s32.totalorder %s175, %s176
      %p187 = scmp.eq.s32.totalorder %s26, 0
      %p188 = por %p186, %p187
      %p189 = scmp.ne.s32.totalorder %s175, %s176
      %p190 = scmp.eq.s32.totalorder %s27, 1
      %p191 = por %p189, %p190
      %p193 = scmp.ne.s32.totalorder %s176, %s192
      %p194 = scmp.eq.s32.totalorder %s27, 0
      %p195 = por %p193, %p194
      %p196 = scmp.le.s32.totalorder 1, %s21
      %p197 = scmp.lt.s32.totalorder %s21, 3
      %p198 = pnand %p196, %p197
      %p199 = pneg %p198
      // Predicated region
      $region9: #{tpu_custom_call.1} parent=5 // pred_check
        _
      $region10: #{tpu_custom_call.1} parent=5 // pred_check_branch
        %201 = sbr.rel (%p198) target = $region12
      $region11: #{tpu_custom_call.1} parent=5 // pred_region
        %s202 = ssub.s32 %s21, 1
        // Predicated region
        $region13: #{tpu_custom_call.1} parent=11 // pred_check
          %p203 = pneg %p115
        $region14: #{tpu_custom_call.1} parent=11 // pred_check_branch
          %205 = sbr.rel (%p203) target = $region16
        $region15: #{tpu_custom_call.1} parent=11 // pred_region
          %s206 = smul.u32 32, %s31
          %208 = vsyncadd [#allocation7], 0
          %s209 = smul.addr %s206, 4
          %s210 = scalar_lea.hbm %s2, %s209
          %s211 = sshll.u32 %s210, 4
          %s212 = int_to_ptr.hbm [resolvable:$true] %s211
          %s213 = sshll.u32 [#allocation8], 4
          %s214 = int_to_ptr.vmem [resolvable:$true] %s213
          %219 = dma.hbm_to_vmem [thread:$0]  %s212, 2048, %s214, [#allocation7], 64, 64, 4
        $region16: #{tpu_custom_call.1} parent=11 // pred_fallthru
          _
        // Predicated region
        $region17: #{tpu_custom_call.1} parent=11 // pred_check
          %p220 = pneg %p141
        $region18: #{tpu_custom_call.1} parent=11 // pred_check_branch
          %222 = sbr.rel (%p220) target = $region20
        $region19: #{tpu_custom_call.1} parent=11 // pred_region
          %s223 = smul.u32 32, %s31
          %225 = vsyncadd [#allocation10], 0
          %s226 = smul.addr %s223, 4
          %s227 = scalar_lea.hbm %s3, %s226
          %s228 = sshll.u32 %s227, 4
          %s229 = int_to_ptr.hbm [resolvable:$true] %s228
          %s230 = sshll.u32 [#allocation9], 4
          %s231 = int_to_ptr.vmem [resolvable:$true] %s230
          %236 = dma.hbm_to_vmem [thread:$0]  %s229, 2048, %s231, [#allocation10], 64, 64, 4
        $region20: #{tpu_custom_call.1} parent=11 // pred_fallthru
          _
        // Predicated region
        $region21: #{tpu_custom_call.1} parent=11 // pred_check
          %p237 = pneg %p162
        $region22: #{tpu_custom_call.1} parent=11 // pred_check_branch
          %239 = sbr.rel (%p237) target = $region24
        $region23: #{tpu_custom_call.1} parent=11 // pred_region
          _
        $region24: #{tpu_custom_call.1} parent=11 // pred_fallthru
          _
      $region12: #{tpu_custom_call.1} parent=5 // pred_fallthru
        _
      %p240 = scmp.lt.s32.totalorder %s21, 2
      // Predicated region
      $region25: #{tpu_custom_call.1} parent=5 // pred_check
        %p241 = pneg %p240
      $region26: #{tpu_custom_call.1} parent=5 // pred_check_branch
        %243 = sbr.rel (%p241) target = $region28
      $region27: #{tpu_custom_call.1} parent=5 // pred_region
        // Predicated region
        $region29: #{tpu_custom_call.1} parent=27 // pred_check
          %p244 = pneg %p55
        $region30: #{tpu_custom_call.1} parent=27 // pred_check_branch
          %246 = sbr.rel (%p244) target = $region32
        $region31: #{tpu_custom_call.1} parent=27 // pred_region
          %s247 = sand.u32 %s45, 1
          %s248 = scalar_lea.sflag [#allocation4], %s247
          %s249 = sand.u32 %s45, 1
          %s250 = smul.addr %s249, 128
          %s251 = scalar_lea.vmem [#allocation3], %s250
          %s252 = smul.u32 16, %s28
          %s253 = smul.u32 2, %s29
          %255 = vsyncadd %s248, 0
          %s256 = smul.addr %s252, 2
          %s257 = sadd.s32 %s253, %s256
          %s258 = smul.addr %s257, 4
          %s259 = scalar_lea.hbm %s0, %s258
          %s260 = sshll.u32 %s259, 4
          %s261 = int_to_ptr.hbm [resolvable:$true] %s260
          %s262 = sshll.u32 %s251, 4
          %s263 = int_to_ptr.vmem [resolvable:$true] %s262
          %268 = dma.hbm_to_vmem [thread:$0]  %s261, 2048, %s263, %s248, 128, 128, 8
        $region32: #{tpu_custom_call.1} parent=27 // pred_fallthru
          _
        // Predicated region
        $region33: #{tpu_custom_call.1} parent=27 // pred_check
          %p269 = pneg %p83
        $region34: #{tpu_custom_call.1} parent=27 // pred_check_branch
          %271 = sbr.rel (%p269) target = $region36
        $region35: #{tpu_custom_call.1} parent=27 // pred_region
          %s272 = sand.u32 %s21, 1
          %s273 = scalar_lea.sflag [#allocation7], %s272
          %s274 = sand.u32 %s73, 1
          %s275 = smul.addr %s274, 128
          %s276 = scalar_lea.vmem [#allocation6], %s275
          %s277 = smul.u32 16, %s28
          %s278 = smul.u32 2, %s29
          %280 = vsyncadd %s273, 0
          %s281 = smul.addr %s277, 2
          %s282 = sadd.s32 %s278, %s281
          %s283 = smul.addr %s282, 4
          %s284 = scalar_lea.hbm %s1, %s283
          %s285 = sshll.u32 %s284, 4
          %s286 = int_to_ptr.hbm [resolvable:$true] %s285
          %s287 = sshll.u32 %s276, 4
          %s288 = int_to_ptr.vmem [resolvable:$true] %s287
          %293 = dma.hbm_to_vmem [thread:$0]  %s286, 2048, %s288, %s273, 128, 128, 8
        $region36: #{tpu_custom_call.1} parent=27 // pred_fallthru
          _
      $region28: #{tpu_custom_call.1} parent=5 // pred_fallthru
        _
      %p294 = scmp.le.s32.totalorder 1, %s21
      %p295 = scmp.lt.s32.totalorder %s21, 3
      %p296 = pnand %p294, %p295
      %p297 = pneg %p296
      // Predicated region
      $region37: #{tpu_custom_call.1} parent=5 // pred_check
        _
      $region38: #{tpu_custom_call.1} parent=5 // pred_check_branch
        %299 = sbr.rel (%p296) target = $region40
      $region39: #{tpu_custom_call.1} parent=5 // pred_region
        %s300 = ssub.s32 %s21, 1
        %s301 = sand.u32 %s48, 1
        %s302 = scalar_lea.sflag [#allocation4], %s301
        %s303 = sand.u32 %s48, 1
        %s304 = smul.addr %s303, 128
        %s305 = scalar_lea.vmem [#allocation3], %s304
        // Predicated region
        $region41: #{tpu_custom_call.1} parent=39 // pred_check
          %p306 = pneg %p61
        $region42: #{tpu_custom_call.1} parent=39 // pred_check_branch
          %308 = sbr.rel (%p306) target = $region44
        $region43: #{tpu_custom_call.1} parent=39 // pred_region
          %310 = dma.done %s302, 2048
        $region44: #{tpu_custom_call.1} parent=39 // pred_fallthru
          _
        %s311 = sand.u32 %s26, 1
        %s312 = scalar_lea.sflag [#allocation7], %s311
        %s313 = sand.u32 %s76, 1
        %s314 = smul.addr %s313, 128
        %s315 = scalar_lea.vmem [#allocation6], %s314
        // Predicated region
        $region45: #{tpu_custom_call.1} parent=39 // pred_check
          %p316 = pneg %p89
        $region46: #{tpu_custom_call.1} parent=39 // pred_check_branch
          %318 = sbr.rel (%p316) target = $region48
        $region47: #{tpu_custom_call.1} parent=39 // pred_region
          %320 = dma.done %s312, 2048
        $region48: #{tpu_custom_call.1} parent=39 // pred_fallthru
          _
        // Predicated region
        $region49: #{tpu_custom_call.1} parent=39 // pred_check
          %p321 = pneg %p115
        $region50: #{tpu_custom_call.1} parent=39 // pred_check_branch
          %323 = sbr.rel (%p321) target = $region52
        $region51: #{tpu_custom_call.1} parent=39 // pred_region
          %325 = dma.done [#allocation7], 2048
        $region52: #{tpu_custom_call.1} parent=39 // pred_fallthru
          _
        // Predicated region
        $region53: #{tpu_custom_call.1} parent=39 // pred_check
          %p326 = pneg %p141
        $region54: #{tpu_custom_call.1} parent=39 // pred_check_branch
          %328 = sbr.rel (%p326) target = $region56
        $region55: #{tpu_custom_call.1} parent=39 // pred_region
          %330 = dma.done [#allocation10], 2048
        $region56: #{tpu_custom_call.1} parent=39 // pred_fallthru
          _
        %s331 = sand.u32 %s48, 1
        %s332 = scalar_lea.sflag [#allocation4], %s331
        %s333 = sand.u32 %s48, 1
        %s334 = smul.addr %s333, 128
        %s335 = scalar_lea.vmem [#allocation3], %s334
        %p336 = pneg %p61
        %p337 = pneg %p58
        %s338 = sand.u32 %s26, 1
        %s339 = scalar_lea.sflag [#allocation7], %s338
        %s340 = sand.u32 %s76, 1
        %s341 = smul.addr %s340, 128
        %s342 = scalar_lea.vmem [#allocation6], %s341
        %p343 = pneg %p89
        %p344 = pneg %p86
        %p345 = pneg %p115
        %p346 = pneg %p112
        %p347 = pneg %p141
        %p348 = pneg %p138
        %p349 = pneg %p162
        %p350 = pneg %p159
        %p351 = pneg %p188
        %p352 = pneg %p185
        %s353 = sand.u32 %s175, 1
        %s354 = scalar_lea.sflag [#allocation5], %s353
        %s355 = sand.u32 %s175, 1
        %s356 = smul.addr %s355, 128
        %s357 = scalar_lea.vmem [#allocation11], %s356
        %s358 = smul.u32 16, %s30
        %s359 = smul.u32 2, %s31
        %s360 = smul.u32 16, %s30
        %s361 = smul.u32 2, %s31
        %s362 = smul.u32 32, %s31
        %s363 = smul.u32 32, %s31
        %s364 = smul.u32 16, %s30
        %p365 = scmp.eq.s32.totalorder %s31, 0
        // Predicated region
        $region57: #{tpu_custom_call.1} parent=39 // pred_check
          %p366 = pneg %p365
        $region58: #{tpu_custom_call.1} parent=39 // pred_check_branch
          %368 = sbr.rel (%p366) target = $region60
        $region59: #{tpu_custom_call.1} parent=39 // pred_region
          %369 = vst [vmem:[#allocation2] sm:$0xff] 0.0
          %370 = vst [vmem:[#allocation2 + $0x8] sm:$0xff] 0.0
          %371 = vst [vmem:[#allocation2 + $0x10] sm:$0xff] 0.0
          %372 = vst [vmem:[#allocation2 + $0x18] sm:$0xff] 0.0
          %373 = vst [vmem:[#allocation2 + $0x20] sm:$0xff] 0.0
          %374 = vst [vmem:[#allocation2 + $0x28] sm:$0xff] 0.0
          %375 = vst [vmem:[#allocation2 + $0x30] sm:$0xff] 0.0
          %376 = vst [vmem:[#allocation2 + $0x38] sm:$0xff] 0.0
          %377 = vst [vmem:[#allocation2 + $0x40] sm:$0xff] 0.0
          %378 = vst [vmem:[#allocation2 + $0x48] sm:$0xff] 0.0
          %379 = vst [vmem:[#allocation2 + $0x50] sm:$0xff] 0.0
          %380 = vst [vmem:[#allocation2 + $0x58] sm:$0xff] 0.0
          %381 = vst [vmem:[#allocation2 + $0x60] sm:$0xff] 0.0
          %382 = vst [vmem:[#allocation2 + $0x68] sm:$0xff] 0.0
          %383 = vst [vmem:[#allocation2 + $0x70] sm:$0xff] 0.0
          %384 = vst [vmem:[#allocation2 + $0x78] sm:$0xff] 0.0
        $region60: #{tpu_custom_call.1} parent=39 // pred_fallthru
          _
        %v385 = vld [vmem:[#allocation2] sm:$0xff]
        %v386 = vld [vmem:[#allocation2 + $0x8] sm:$0xff]
        %v387 = vld [vmem:[#allocation2 + $0x10] sm:$0xff]
        %v388 = vld [vmem:[#allocation2 + $0x18] sm:$0xff]
        %v389 = vld [vmem:[#allocation2 + $0x20] sm:$0xff]
        %v390 = vld [vmem:[#allocation2 + $0x28] sm:$0xff]
        %v391 = vld [vmem:[#allocation2 + $0x30] sm:$0xff]
        %v392 = vld [vmem:[#allocation2 + $0x38] sm:$0xff]
        %v393 = vld [vmem:[#allocation2 + $0x40] sm:$0xff]
        %v394 = vld [vmem:[#allocation2 + $0x48] sm:$0xff]
        %v395 = vld [vmem:[#allocation2 + $0x50] sm:$0xff]
        %v396 = vld [vmem:[#allocation2 + $0x58] sm:$0xff]
        %v397 = vld [vmem:[#allocation2 + $0x60] sm:$0xff]
        %v398 = vld [vmem:[#allocation2 + $0x68] sm:$0xff]
        %v399 = vld [vmem:[#allocation2 + $0x70] sm:$0xff]
        %v400 = vld [vmem:[#allocation2 + $0x78] sm:$0xff]
        %v401 = vld [vmem:[%s305] sm:$0xff]
        %v402 = vld [vmem:[%s305 + $0x8] sm:$0xff]
        %v403 = vld [vmem:[%s305 + $0x10] sm:$0xff]
        %v404 = vld [vmem:[%s305 + $0x18] sm:$0xff]
        %v405 = vld [vmem:[%s305 + $0x20] sm:$0xff]
        %v406 = vld [vmem:[%s305 + $0x28] sm:$0xff]
        %v407 = vld [vmem:[%s305 + $0x30] sm:$0xff]
        %v408 = vld [vmem:[%s305 + $0x38] sm:$0xff]
        %v409 = vld [vmem:[%s305 + $0x40] sm:$0xff]
        %v410 = vld [vmem:[%s305 + $0x48] sm:$0xff]
        %v411 = vld [vmem:[%s305 + $0x50] sm:$0xff]
        %v412 = vld [vmem:[%s305 + $0x58] sm:$0xff]
        %v413 = vld [vmem:[%s305 + $0x60] sm:$0xff]
        %v414 = vld [vmem:[%s305 + $0x68] sm:$0xff]
        %v415 = vld [vmem:[%s305 + $0x70] sm:$0xff]
        %v416 = vld [vmem:[%s305 + $0x78] sm:$0xff]
        %v417 = vld [vmem:[#allocation8] sm:$0xf]
        %v418 = vld [vmem:[#allocation8 + $0x4] sm:$0xf]
        %v419 = vld [vmem:[#allocation8 + $0x8] sm:$0xf]
        %v420 = vld [vmem:[#allocation8 + $0xc] sm:$0xf]
        %v421 = vld [vmem:[#allocation8 + $0x10] sm:$0xf]
        %v422 = vld [vmem:[#allocation8 + $0x14] sm:$0xf]
        %v423 = vld [vmem:[#allocation8 + $0x18] sm:$0xf]
        %v424 = vld [vmem:[#allocation8 + $0x1c] sm:$0xf]
        %v425 = vld [vmem:[#allocation8 + $0x20] sm:$0xf]
        %v426 = vld [vmem:[#allocation8 + $0x24] sm:$0xf]
        %v427 = vld [vmem:[#allocation8 + $0x28] sm:$0xf]
        %v428 = vld [vmem:[#allocation8 + $0x2c] sm:$0xf]
        %v429 = vld [vmem:[#allocation8 + $0x30] sm:$0xf]
        %v430 = vld [vmem:[#allocation8 + $0x34] sm:$0xf]
        %v431 = vld [vmem:[#allocation8 + $0x38] sm:$0xf]
        %v432 = vld [vmem:[#allocation8 + $0x3c] sm:$0xf]
        %v433 = vld [vmem:[#allocation8 + $0x40] sm:$0xf]
        %v434 = vld [vmem:[#allocation8 + $0x44] sm:$0xf]
        %v435 = vld [vmem:[#allocation8 + $0x48] sm:$0xf]
        %v436 = vld [vmem:[#allocation8 + $0x4c] sm:$0xf]
        %v437 = vld [vmem:[#allocation8 + $0x50] sm:$0xf]
        %v438 = vld [vmem:[#allocation8 + $0x54] sm:$0xf]
        %v439 = vld [vmem:[#allocation8 + $0x58] sm:$0xf]
        %v440 = vld [vmem:[#allocation8 + $0x5c] sm:$0xf]
        %v441 = vld [vmem:[#allocation8 + $0x60] sm:$0xf]
        %v442 = vld [vmem:[#allocation8 + $0x64] sm:$0xf]
        %v443 = vld [vmem:[#allocation8 + $0x68] sm:$0xf]
        %v444 = vld [vmem:[#allocation8 + $0x6c] sm:$0xf]
        %v445 = vld [vmem:[#allocation8 + $0x70] sm:$0xf]
        %v446 = vld [vmem:[#allocation8 + $0x74] sm:$0xf]
        %v447 = vld [vmem:[#allocation8 + $0x78] sm:$0xf]
        %v448 = vld [vmem:[#allocation8 + $0x7c] sm:$0xf]
        %v465 = vunpack.c.l.b16 %v401
        %v466 = vunpack.c.h.b16 %v401
        %v467 = vunpack.c.l.b16 %v402
        %v468 = vunpack.c.h.b16 %v402
        %v469 = vunpack.c.l.b16 %v403
        %v470 = vunpack.c.h.b16 %v403
        %v471 = vunpack.c.l.b16 %v404
        %v472 = vunpack.c.h.b16 %v404
        %v473 = vunpack.c.l.b16 %v405
        %v474 = vunpack.c.h.b16 %v405
        %v475 = vunpack.c.l.b16 %v406
        %v476 = vunpack.c.h.b16 %v406
        %v477 = vunpack.c.l.b16 %v407
        %v478 = vunpack.c.h.b16 %v407
        %v479 = vunpack.c.l.b16 %v408
        %v480 = vunpack.c.h.b16 %v408
        %v481 = vunpack.c.l.b16 %v409
        %v482 = vunpack.c.h.b16 %v409
        %v483 = vunpack.c.l.b16 %v410
        %v484 = vunpack.c.h.b16 %v410
        %v485 = vunpack.c.l.b16 %v411
        %v486 = vunpack.c.h.b16 %v411
        %v487 = vunpack.c.l.b16 %v412
        %v488 = vunpack.c.h.b16 %v412
        %v489 = vunpack.c.l.b16 %v413
        %v490 = vunpack.c.h.b16 %v413
        %v491 = vunpack.c.l.b16 %v414
        %v492 = vunpack.c.h.b16 %v414
        %v493 = vunpack.c.l.b16 %v415
        %v494 = vunpack.c.h.b16 %v415
        %v495 = vunpack.c.l.b16 %v416
        %v496 = vunpack.c.h.b16 %v416
        %v497 = vpack.c.b16 %v467, %v465
        %v498 = vpack.c.b16 %v468, %v466
        %v499 = vpack.c.b16 %v471, %v469
        %v500 = vpack.c.b16 %v472, %v470
        %v501 = vpack.c.b16 %v475, %v473
        %v502 = vpack.c.b16 %v476, %v474
        %v503 = vpack.c.b16 %v479, %v477
        %v504 = vpack.c.b16 %v480, %v478
        %v505 = vpack.c.b16 %v483, %v481
        %v506 = vpack.c.b16 %v484, %v482
        %v507 = vpack.c.b16 %v487, %v485
        %v508 = vpack.c.b16 %v488, %v486
        %v509 = vpack.c.b16 %v491, %v489
        %v510 = vpack.c.b16 %v492, %v490
        %v511 = vpack.c.b16 %v495, %v493
        %v512 = vpack.c.b16 %v496, %v494
        %v561 = vunpack.c.l.b16 %v417
        %v562 = vunpack.c.l.b16 %v418
        %v563 = vunpack.c.l.b16 %v419
        %v564 = vunpack.c.l.b16 %v420
        %v565 = vunpack.c.l.b16 %v421
        %v566 = vunpack.c.l.b16 %v422
        %v567 = vunpack.c.l.b16 %v423
        %v568 = vunpack.c.l.b16 %v424
        %v569 = vunpack.c.l.b16 %v425
        %v570 = vunpack.c.l.b16 %v426
        %v571 = vunpack.c.l.b16 %v427
        %v572 = vunpack.c.l.b16 %v428
        %v573 = vunpack.c.l.b16 %v429
        %v574 = vunpack.c.l.b16 %v430
        %v575 = vunpack.c.l.b16 %v431
        %v576 = vunpack.c.l.b16 %v432
        %v577 = vunpack.c.l.b16 %v433
        %v578 = vunpack.c.l.b16 %v434
        %v579 = vunpack.c.l.b16 %v435
        %v580 = vunpack.c.l.b16 %v436
        %v581 = vunpack.c.l.b16 %v437
        %v582 = vunpack.c.l.b16 %v438
        %v583 = vunpack.c.l.b16 %v439
        %v584 = vunpack.c.l.b16 %v440
        %v585 = vunpack.c.l.b16 %v441
        %v586 = vunpack.c.l.b16 %v442
        %v587 = vunpack.c.l.b16 %v443
        %v588 = vunpack.c.l.b16 %v444
        %v589 = vunpack.c.l.b16 %v445
        %v590 = vunpack.c.l.b16 %v446
        %v591 = vunpack.c.l.b16 %v447
        %v592 = vunpack.c.l.b16 %v448
        %v593 = vpack.c.b16 %v562, %v561
        %v594 = vpack.c.b16 %v564, %v563
        %v595 = vpack.c.b16 %v566, %v565
        %v596 = vpack.c.b16 %v568, %v567
        %v597 = vpack.c.b16 %v570, %v569
        %v598 = vpack.c.b16 %v572, %v571
        %v599 = vpack.c.b16 %v574, %v573
        %v600 = vpack.c.b16 %v576, %v575
        %v601 = vpack.c.b16 %v578, %v577
        %v602 = vpack.c.b16 %v580, %v579
        %v603 = vpack.c.b16 %v582, %v581
        %v604 = vpack.c.b16 %v584, %v583
        %v605 = vpack.c.b16 %v586, %v585
        %v606 = vpack.c.b16 %v588, %v587
        %v607 = vpack.c.b16 %v590, %v589
        %v608 = vpack.c.b16 %v592, %v591
        %625 = vmatpush.bf16.msra.mxu0 %v600
        %626 = vmatpush.bf16.msra.mxu0 %v599
        %627 = vmatpush.bf16.msra.mxu0 %v598
        %628 = vmatpush.bf16.msra.mxu0 %v597
        %629 = vmatpush.bf16.msra.mxu0 %v596
        %630 = vmatpush.bf16.msra.mxu0 %v595
        %631 = vmatpush.bf16.msra.mxu0 %v594
        %632 = vmatpush.bf16.msra.mxu0 %v593
        %633 = vmatmul.bf16.gmra.mxu0 %v497
        %v634 = vpop.f32.mrf.mxu0
        %v635 = vadd.f32 0.0, %v634
        %v636 = vpop.f32.mrf.mxu0
        %v637 = vadd.f32 0.0, %v636
        %638 = vmatmul.bf16.gmra.mxu0 %v499
        %v639 = vpop.f32.mrf.mxu0
        %v640 = vadd.f32 0.0, %v639
        %v641 = vpop.f32.mrf.mxu0
        %v642 = vadd.f32 0.0, %v641
        %643 = vmatmul.bf16.gmra.mxu0 %v501
        %v644 = vpop.f32.mrf.mxu0
        %v645 = vadd.f32 0.0, %v644
        %v646 = vpop.f32.mrf.mxu0
        %v647 = vadd.f32 0.0, %v646
        %648 = vmatmul.bf16.gmra.mxu0 %v503
        %v649 = vpop.f32.mrf.mxu0
        %v650 = vadd.f32 0.0, %v649
        %v651 = vpop.f32.mrf.mxu0
        %v652 = vadd.f32 0.0, %v651
        %653 = vmatmul.bf16.gmra.mxu0 %v505
        %v654 = vpop.f32.mrf.mxu0
        %v655 = vadd.f32 0.0, %v654
        %v656 = vpop.f32.mrf.mxu0
        %v657 = vadd.f32 0.0, %v656
        %658 = vmatmul.bf16.gmra.mxu0 %v507
        %v659 = vpop.f32.mrf.mxu0
        %v660 = vadd.f32 0.0, %v659
        %v661 = vpop.f32.mrf.mxu0
        %v662 = vadd.f32 0.0, %v661
        %663 = vmatmul.bf16.gmra.mxu0 %v509
        %v664 = vpop.f32.mrf.mxu0
        %v665 = vadd.f32 0.0, %v664
        %v666 = vpop.f32.mrf.mxu0
        %v667 = vadd.f32 0.0, %v666
        %668 = vmatmul.bf16.gmra.mxu0 %v511
        %v669 = vpop.f32.mrf.mxu0
        %v670 = vadd.f32 0.0, %v669
        %v671 = vpop.f32.mrf.mxu0
        %v672 = vadd.f32 0.0, %v671
        %673 = vdwg.mxu0
        %674 = vmatpush.bf16.msra.mxu0 %v608
        %675 = vmatpush.bf16.msra.mxu0 %v607
        %676 = vmatpush.bf16.msra.mxu0 %v606
        %677 = vmatpush.bf16.msra.mxu0 %v605
        %678 = vmatpush.bf16.msra.mxu0 %v604
        %679 = vmatpush.bf16.msra.mxu0 %v603
        %680 = vmatpush.bf16.msra.mxu0 %v602
        %681 = vmatpush.bf16.msra.mxu0 %v601
        %682 = vmatmul.bf16.gmra.mxu0 %v498
        %v683 = vpop.f32.mrf.mxu0
        %v684 = vadd.f32 %v635, %v683
        %v685 = vpop.f32.mrf.mxu0
        %v686 = vadd.f32 %v637, %v685
        %687 = vmatmul.bf16.gmra.mxu0 %v500
        %v688 = vpop.f32.mrf.mxu0
        %v689 = vadd.f32 %v640, %v688
        %v690 = vpop.f32.mrf.mxu0
        %v691 = vadd.f32 %v642, %v690
        %692 = vmatmul.bf16.gmra.mxu0 %v502
        %v693 = vpop.f32.mrf.mxu0
        %v694 = vadd.f32 %v645, %v693
        %v695 = vpop.f32.mrf.mxu0
        %v696 = vadd.f32 %v647, %v695
        %697 = vmatmul.bf16.gmra.mxu0 %v504
        %v698 = vpop.f32.mrf.mxu0
        %v699 = vadd.f32 %v650, %v698
        %v700 = vpop.f32.mrf.mxu0
        %v701 = vadd.f32 %v652, %v700
        %702 = vmatmul.bf16.gmra.mxu0 %v506
        %v703 = vpop.f32.mrf.mxu0
        %v704 = vadd.f32 %v655, %v703
        %v705 = vpop.f32.mrf.mxu0
        %v706 = vadd.f32 %v657, %v705
        %707 = vmatmul.bf16.gmra.mxu0 %v508
        %v708 = vpop.f32.mrf.mxu0
        %v709 = vadd.f32 %v660, %v708
        %v710 = vpop.f32.mrf.mxu0
        %v711 = vadd.f32 %v662, %v710
        %712 = vmatmul.bf16.gmra.mxu0 %v510
        %v713 = vpop.f32.mrf.mxu0
        %v714 = vadd.f32 %v665, %v713
        %v715 = vpop.f32.mrf.mxu0
        %v716 = vadd.f32 %v667, %v715
        %717 = vmatmul.bf16.gmra.mxu0 %v512
        %v718 = vpop.f32.mrf.mxu0
        %v719 = vadd.f32 %v670, %v718
        %v720 = vpop.f32.mrf.mxu0
        %v721 = vadd.f32 %v672, %v720
        %722 = vdwg.mxu0
        %v723 = vadd.f32 %v385, %v684
        %v724 = vadd.f32 %v386, %v686
        %v725 = vadd.f32 %v387, %v689
        %v726 = vadd.f32 %v388, %v691
        %v727 = vadd.f32 %v389, %v694
        %v728 = vadd.f32 %v390, %v696
        %v729 = vadd.f32 %v391, %v699
        %v730 = vadd.f32 %v392, %v701
        %v731 = vadd.f32 %v393, %v704
        %v732 = vadd.f32 %v394, %v706
        %v733 = vadd.f32 %v395, %v709
        %v734 = vadd.f32 %v396, %v711
        %v735 = vadd.f32 %v397, %v714
        %v736 = vadd.f32 %v398, %v716
        %v737 = vadd.f32 %v399, %v719
        %v738 = vadd.f32 %v400, %v721
        %739 = vst [vmem:[#allocation2] sm:$0xff] %v723
        %740 = vst [vmem:[#allocation2 + $0x8] sm:$0xff] %v724
        %741 = vst [vmem:[#allocation2 + $0x10] sm:$0xff] %v725
        %742 = vst [vmem:[#allocation2 + $0x18] sm:$0xff] %v726
        %743 = vst [vmem:[#allocation2 + $0x20] sm:$0xff] %v727
        %744 = vst [vmem:[#allocation2 + $0x28] sm:$0xff] %v728
        %745 = vst [vmem:[#allocation2 + $0x30] sm:$0xff] %v729
        %746 = vst [vmem:[#allocation2 + $0x38] sm:$0xff] %v730
        %747 = vst [vmem:[#allocation2 + $0x40] sm:$0xff] %v731
        %748 = vst [vmem:[#allocation2 + $0x48] sm:$0xff] %v732
        %749 = vst [vmem:[#allocation2 + $0x50] sm:$0xff] %v733
        %750 = vst [vmem:[#allocation2 + $0x58] sm:$0xff] %v734
        %751 = vst [vmem:[#allocation2 + $0x60] sm:$0xff] %v735
        %752 = vst [vmem:[#allocation2 + $0x68] sm:$0xff] %v736
        %753 = vst [vmem:[#allocation2 + $0x70] sm:$0xff] %v737
        %754 = vst [vmem:[#allocation2 + $0x78] sm:$0xff] %v738
        %v755 = vld [vmem:[#allocation2] sm:$0xff]
        %v756 = vld [vmem:[#allocation2 + $0x8] sm:$0xff]
        %v757 = vld [vmem:[#allocation2 + $0x10] sm:$0xff]
        %v758 = vld [vmem:[#allocation2 + $0x18] sm:$0xff]
        %v759 = vld [vmem:[#allocation2 + $0x20] sm:$0xff]
        %v760 = vld [vmem:[#allocation2 + $0x28] sm:$0xff]
        %v761 = vld [vmem:[#allocation2 + $0x30] sm:$0xff]
        %v762 = vld [vmem:[#allocation2 + $0x38] sm:$0xff]
        %v763 = vld [vmem:[#allocation2 + $0x40] sm:$0xff]
        %v764 = vld [vmem:[#allocation2 + $0x48] sm:$0xff]
        %v765 = vld [vmem:[#allocation2 + $0x50] sm:$0xff]
        %v766 = vld [vmem:[#allocation2 + $0x58] sm:$0xff]
        %v767 = vld [vmem:[#allocation2 + $0x60] sm:$0xff]
        %v768 = vld [vmem:[#allocation2 + $0x68] sm:$0xff]
        %v769 = vld [vmem:[#allocation2 + $0x70] sm:$0xff]
        %v770 = vld [vmem:[#allocation2 + $0x78] sm:$0xff]
        %v771 = vld [vmem:[%s315] sm:$0xff]
        %v772 = vld [vmem:[%s315 + $0x8] sm:$0xff]
        %v773 = vld [vmem:[%s315 + $0x10] sm:$0xff]
        %v774 = vld [vmem:[%s315 + $0x18] sm:$0xff]
        %v775 = vld [vmem:[%s315 + $0x20] sm:$0xff]
        %v776 = vld [vmem:[%s315 + $0x28] sm:$0xff]
        %v777 = vld [vmem:[%s315 + $0x30] sm:$0xff]
        %v778 = vld [vmem:[%s315 + $0x38] sm:$0xff]
        %v779 = vld [vmem:[%s315 + $0x40] sm:$0xff]
        %v780 = vld [vmem:[%s315 + $0x48] sm:$0xff]
        %v781 = vld [vmem:[%s315 + $0x50] sm:$0xff]
        %v782 = vld [vmem:[%s315 + $0x58] sm:$0xff]
        %v783 = vld [vmem:[%s315 + $0x60] sm:$0xff]
        %v784 = vld [vmem:[%s315 + $0x68] sm:$0xff]
        %v785 = vld [vmem:[%s315 + $0x70] sm:$0xff]
        %v786 = vld [vmem:[%s315 + $0x78] sm:$0xff]
        %v787 = vld [vmem:[#allocation9] sm:$0xf]
        %v788 = vld [vmem:[#allocation9 + $0x4] sm:$0xf]
        %v789 = vld [vmem:[#allocation9 + $0x8] sm:$0xf]
        %v790 = vld [vmem:[#allocation9 + $0xc] sm:$0xf]
        %v791 = vld [vmem:[#allocation9 + $0x10] sm:$0xf]
        %v792 = vld [vmem:[#allocation9 + $0x14] sm:$0xf]
        %v793 = vld [vmem:[#allocation9 + $0x18] sm:$0xf]
        %v794 = vld [vmem:[#allocation9 + $0x1c] sm:$0xf]
        %v795 = vld [vmem:[#allocation9 + $0x20] sm:$0xf]
        %v796 = vld [vmem:[#allocation9 + $0x24] sm:$0xf]
        %v797 = vld [vmem:[#allocation9 + $0x28] sm:$0xf]
        %v798 = vld [vmem:[#allocation9 + $0x2c] sm:$0xf]
        %v799 = vld [vmem:[#allocation9 + $0x30] sm:$0xf]
        %v800 = vld [vmem:[#allocation9 + $0x34] sm:$0xf]
        %v801 = vld [vmem:[#allocation9 + $0x38] sm:$0xf]
        %v802 = vld [vmem:[#allocation9 + $0x3c] sm:$0xf]
        %v803 = vld [vmem:[#allocation9 + $0x40] sm:$0xf]
        %v804 = vld [vmem:[#allocation9 + $0x44] sm:$0xf]
        %v805 = vld [vmem:[#allocation9 + $0x48] sm:$0xf]
        %v806 = vld [vmem:[#allocation9 + $0x4c] sm:$0xf]
        %v807 = vld [vmem:[#allocation9 + $0x50] sm:$0xf]
        %v808 = vld [vmem:[#allocation9 + $0x54] sm:$0xf]
        %v809 = vld [vmem:[#allocation9 + $0x58] sm:$0xf]
        %v810 = vld [vmem:[#allocation9 + $0x5c] sm:$0xf]
        %v811 = vld [vmem:[#allocation9 + $0x60] sm:$0xf]
        %v812 = vld [vmem:[#allocation9 + $0x64] sm:$0xf]
        %v813 = vld [vmem:[#allocation9 + $0x68] sm:$0xf]
        %v814 = vld [vmem:[#allocation9 + $0x6c] sm:$0xf]
        %v815 = vld [vmem:[#allocation9 + $0x70] sm:$0xf]
        %v816 = vld [vmem:[#allocation9 + $0x74] sm:$0xf]
        %v817 = vld [vmem:[#allocation9 + $0x78] sm:$0xf]
        %v818 = vld [vmem:[#allocation9 + $0x7c] sm:$0xf]
        %v835 = vunpack.c.l.b16 %v771
        %v836 = vunpack.c.h.b16 %v771
        %v837 = vunpack.c.l.b16 %v772
        %v838 = vunpack.c.h.b16 %v772
        %v839 = vunpack.c.l.b16 %v773
        %v840 = vunpack.c.h.b16 %v773
        %v841 = vunpack.c.l.b16 %v774
        %v842 = vunpack.c.h.b16 %v774
        %v843 = vunpack.c.l.b16 %v775
        %v844 = vunpack.c.h.b16 %v775
        %v845 = vunpack.c.l.b16 %v776
        %v846 = vunpack.c.h.b16 %v776
        %v847 = vunpack.c.l.b16 %v777
        %v848 = vunpack.c.h.b16 %v777
        %v849 = vunpack.c.l.b16 %v778
        %v850 = vunpack.c.h.b16 %v778
        %v851 = vunpack.c.l.b16 %v779
        %v852 = vunpack.c.h.b16 %v779
        %v853 = vunpack.c.l.b16 %v780
        %v854 = vunpack.c.h.b16 %v780
        %v855 = vunpack.c.l.b16 %v781
        %v856 = vunpack.c.h.b16 %v781
        %v857 = vunpack.c.l.b16 %v782
        %v858 = vunpack.c.h.b16 %v782
        %v859 = vunpack.c.l.b16 %v783
        %v860 = vunpack.c.h.b16 %v783
        %v861 = vunpack.c.l.b16 %v784
        %v862 = vunpack.c.h.b16 %v784
        %v863 = vunpack.c.l.b16 %v785
        %v864 = vunpack.c.h.b16 %v785
        %v865 = vunpack.c.l.b16 %v786
        %v866 = vunpack.c.h.b16 %v786
        %v867 = vpack.c.b16 %v837, %v835
        %v868 = vpack.c.b16 %v838, %v836
        %v869 = vpack.c.b16 %v841, %v839
        %v870 = vpack.c.b16 %v842, %v840
        %v871 = vpack.c.b16 %v845, %v843
        %v872 = vpack.c.b16 %v846, %v844
        %v873 = vpack.c.b16 %v849, %v847
        %v874 = vpack.c.b16 %v850, %v848
        %v875 = vpack.c.b16 %v853, %v851
        %v876 = vpack.c.b16 %v854, %v852
        %v877 = vpack.c.b16 %v857, %v855
        %v878 = vpack.c.b16 %v858, %v856
        %v879 = vpack.c.b16 %v861, %v859
        %v880 = vpack.c.b16 %v862, %v860
        %v881 = vpack.c.b16 %v865, %v863
        %v882 = vpack.c.b16 %v866, %v864
        %v931 = vunpack.c.l.b16 %v787
        %v932 = vunpack.c.l.b16 %v788
        %v933 = vunpack.c.l.b16 %v789
        %v934 = vunpack.c.l.b16 %v790
        %v935 = vunpack.c.l.b16 %v791
        %v936 = vunpack.c.l.b16 %v792
        %v937 = vunpack.c.l.b16 %v793
        %v938 = vunpack.c.l.b16 %v794
        %v939 = vunpack.c.l.b16 %v795
        %v940 = vunpack.c.l.b16 %v796
        %v941 = vunpack.c.l.b16 %v797
        %v942 = vunpack.c.l.b16 %v798
        %v943 = vunpack.c.l.b16 %v799
        %v944 = vunpack.c.l.b16 %v800
        %v945 = vunpack.c.l.b16 %v801
        %v946 = vunpack.c.l.b16 %v802
        %v947 = vunpack.c.l.b16 %v803
        %v948 = vunpack.c.l.b16 %v804
        %v949 = vunpack.c.l.b16 %v805
        %v950 = vunpack.c.l.b16 %v806
        %v951 = vunpack.c.l.b16 %v807
        %v952 = vunpack.c.l.b16 %v808
        %v953 = vunpack.c.l.b16 %v809
        %v954 = vunpack.c.l.b16 %v810
        %v955 = vunpack.c.l.b16 %v811
        %v956 = vunpack.c.l.b16 %v812
        %v957 = vunpack.c.l.b16 %v813
        %v958 = vunpack.c.l.b16 %v814
        %v959 = vunpack.c.l.b16 %v815
        %v960 = vunpack.c.l.b16 %v816
        %v961 = vunpack.c.l.b16 %v817
        %v962 = vunpack.c.l.b16 %v818
        %v963 = vpack.c.b16 %v932, %v931
        %v964 = vpack.c.b16 %v934, %v933
        %v965 = vpack.c.b16 %v936, %v935
        %v966 = vpack.c.b16 %v938, %v937
        %v967 = vpack.c.b16 %v940, %v939
        %v968 = vpack.c.b16 %v942, %v941
        %v969 = vpack.c.b16 %v944, %v943
        %v970 = vpack.c.b16 %v946, %v945
        %v971 = vpack.c.b16 %v948, %v947
        %v972 = vpack.c.b16 %v950, %v949
        %v973 = vpack.c.b16 %v952, %v951
        %v974 = vpack.c.b16 %v954, %v953
        %v975 = vpack.c.b16 %v956, %v955
        %v976 = vpack.c.b16 %v958, %v957
        %v977 = vpack.c.b16 %v960, %v959
        %v978 = vpack.c.b16 %v962, %v961
        %995 = vmatpush.bf16.msra.mxu0 %v970
        %996 = vmatpush.bf16.msra.mxu0 %v969
        %997 = vmatpush.bf16.msra.mxu0 %v968
        %998 = vmatpush.bf16.msra.mxu0 %v967
        %999 = vmatpush.bf16.msra.mxu0 %v966
        %1000 = vmatpush.bf16.msra.mxu0 %v965
        %1001 = vmatpush.bf16.msra.mxu0 %v964
        %1002 = vmatpush.bf16.msra.mxu0 %v963
        %1003 = vmatmul.bf16.gmra.mxu0 %v867
        %v1004 = vpop.f32.mrf.mxu0
        %v1005 = vadd.f32 0.0, %v1004
        %v1006 = vpop.f32.mrf.mxu0
        %v1007 = vadd.f32 0.0, %v1006
        %1008 = vmatmul.bf16.gmra.mxu0 %v869
        %v1009 = vpop.f32.mrf.mxu0
        %v1010 = vadd.f32 0.0, %v1009
        %v1011 = vpop.f32.mrf.mxu0
        %v1012 = vadd.f32 0.0, %v1011
        %1013 = vmatmul.bf16.gmra.mxu0 %v871
        %v1014 = vpop.f32.mrf.mxu0
        %v1015 = vadd.f32 0.0, %v1014
        %v1016 = vpop.f32.mrf.mxu0
        %v1017 = vadd.f32 0.0, %v1016
        %1018 = vmatmul.bf16.gmra.mxu0 %v873
        %v1019 = vpop.f32.mrf.mxu0
        %v1020 = vadd.f32 0.0, %v1019
        %v1021 = vpop.f32.mrf.mxu0
        %v1022 = vadd.f32 0.0, %v1021
        %1023 = vmatmul.bf16.gmra.mxu0 %v875
        %v1024 = vpop.f32.mrf.mxu0
        %v1025 = vadd.f32 0.0, %v1024
        %v1026 = vpop.f32.mrf.mxu0
        %v1027 = vadd.f32 0.0, %v1026
        %1028 = vmatmul.bf16.gmra.mxu0 %v877
        %v1029 = vpop.f32.mrf.mxu0
        %v1030 = vadd.f32 0.0, %v1029
        %v1031 = vpop.f32.mrf.mxu0
        %v1032 = vadd.f32 0.0, %v1031
        %1033 = vmatmul.bf16.gmra.mxu0 %v879
        %v1034 = vpop.f32.mrf.mxu0
        %v1035 = vadd.f32 0.0, %v1034
        %v1036 = vpop.f32.mrf.mxu0
        %v1037 = vadd.f32 0.0, %v1036
        %1038 = vmatmul.bf16.gmra.mxu0 %v881
        %v1039 = vpop.f32.mrf.mxu0
        %v1040 = vadd.f32 0.0, %v1039
        %v1041 = vpop.f32.mrf.mxu0
        %v1042 = vadd.f32 0.0, %v1041
        %1043 = vdwg.mxu0
        %1044 = vmatpush.bf16.msra.mxu0 %v978
        %1045 = vmatpush.bf16.msra.mxu0 %v977
        %1046 = vmatpush.bf16.msra.mxu0 %v976
        %1047 = vmatpush.bf16.msra.mxu0 %v975
        %1048 = vmatpush.bf16.msra.mxu0 %v974
        %1049 = vmatpush.bf16.msra.mxu0 %v973
        %1050 = vmatpush.bf16.msra.mxu0 %v972
        %1051 = vmatpush.bf16.msra.mxu0 %v971
        %1052 = vmatmul.bf16.gmra.mxu0 %v868
        %v1053 = vpop.f32.mrf.mxu0
        %v1054 = vadd.f32 %v1005, %v1053
        %v1055 = vpop.f32.mrf.mxu0
        %v1056 = vadd.f32 %v1007, %v1055
        %1057 = vmatmul.bf16.gmra.mxu0 %v870
        %v1058 = vpop.f32.mrf.mxu0
        %v1059 = vadd.f32 %v1010, %v1058
        %v1060 = vpop.f32.mrf.mxu0
        %v1061 = vadd.f32 %v1012, %v1060
        %1062 = vmatmul.bf16.gmra.mxu0 %v872
        %v1063 = vpop.f32.mrf.mxu0
        %v1064 = vadd.f32 %v1015, %v1063
        %v1065 = vpop.f32.mrf.mxu0
        %v1066 = vadd.f32 %v1017, %v1065
        %1067 = vmatmul.bf16.gmra.mxu0 %v874
        %v1068 = vpop.f32.mrf.mxu0
        %v1069 = vadd.f32 %v1020, %v1068
        %v1070 = vpop.f32.mrf.mxu0
        %v1071 = vadd.f32 %v1022, %v1070
        %1072 = vmatmul.bf16.gmra.mxu0 %v876
        %v1073 = vpop.f32.mrf.mxu0
        %v1074 = vadd.f32 %v1025, %v1073
        %v1075 = vpop.f32.mrf.mxu0
        %v1076 = vadd.f32 %v1027, %v1075
        %1077 = vmatmul.bf16.gmra.mxu0 %v878
        %v1078 = vpop.f32.mrf.mxu0
        %v1079 = vadd.f32 %v1030, %v1078
        %v1080 = vpop.f32.mrf.mxu0
        %v1081 = vadd.f32 %v1032, %v1080
        %1082 = vmatmul.bf16.gmra.mxu0 %v880
        %v1083 = vpop.f32.mrf.mxu0
        %v1084 = vadd.f32 %v1035, %v1083
        %v1085 = vpop.f32.mrf.mxu0
        %v1086 = vadd.f32 %v1037, %v1085
        %1087 = vmatmul.bf16.gmra.mxu0 %v882
        %v1088 = vpop.f32.mrf.mxu0
        %v1089 = vadd.f32 %v1040, %v1088
        %v1090 = vpop.f32.mrf.mxu0
        %v1091 = vadd.f32 %v1042, %v1090
        %1092 = vdwg.mxu0
        %v1093 = vadd.f32 %v755, %v1054
        %v1094 = vadd.f32 %v756, %v1056
        %v1095 = vadd.f32 %v757, %v1059
        %v1096 = vadd.f32 %v758, %v1061
        %v1097 = vadd.f32 %v759, %v1064
        %v1098 = vadd.f32 %v760, %v1066
        %v1099 = vadd.f32 %v761, %v1069
        %v1100 = vadd.f32 %v762, %v1071
        %v1101 = vadd.f32 %v763, %v1074
        %v1102 = vadd.f32 %v764, %v1076
        %v1103 = vadd.f32 %v765, %v1079
        %v1104 = vadd.f32 %v766, %v1081
        %v1105 = vadd.f32 %v767, %v1084
        %v1106 = vadd.f32 %v768, %v1086
        %v1107 = vadd.f32 %v769, %v1089
        %v1108 = vadd.f32 %v770, %v1091
        %1109 = vst [vmem:[#allocation2] sm:$0xff] %v1093
        %1110 = vst [vmem:[#allocation2 + $0x8] sm:$0xff] %v1094
        %1111 = vst [vmem:[#allocation2 + $0x10] sm:$0xff] %v1095
        %1112 = vst [vmem:[#allocation2 + $0x18] sm:$0xff] %v1096
        %1113 = vst [vmem:[#allocation2 + $0x20] sm:$0xff] %v1097
        %1114 = vst [vmem:[#allocation2 + $0x28] sm:$0xff] %v1098
        %1115 = vst [vmem:[#allocation2 + $0x30] sm:$0xff] %v1099
        %1116 = vst [vmem:[#allocation2 + $0x38] sm:$0xff] %v1100
        %1117 = vst [vmem:[#allocation2 + $0x40] sm:$0xff] %v1101
        %1118 = vst [vmem:[#allocation2 + $0x48] sm:$0xff] %v1102
        %1119 = vst [vmem:[#allocation2 + $0x50] sm:$0xff] %v1103
        %1120 = vst [vmem:[#allocation2 + $0x58] sm:$0xff] %v1104
        %1121 = vst [vmem:[#allocation2 + $0x60] sm:$0xff] %v1105
        %1122 = vst [vmem:[#allocation2 + $0x68] sm:$0xff] %v1106
        %1123 = vst [vmem:[#allocation2 + $0x70] sm:$0xff] %v1107
        %1124 = vst [vmem:[#allocation2 + $0x78] sm:$0xff] %v1108
        // Predicated region
        $region61: #{tpu_custom_call.1} parent=39 // pred_check
          %p1125 = pneg %p365
        $region62: #{tpu_custom_call.1} parent=39 // pred_check_branch
          %1127 = sbr.rel (%p1125) target = $region64
        $region63: #{tpu_custom_call.1} parent=39 // pred_region
          %v1128 = vld [vmem:[#allocation2] sm:$0xff]
          %v1129 = vld [vmem:[#allocation2 + $0x8] sm:$0xff]
          %v1130 = vld [vmem:[#allocation2 + $0x10] sm:$0xff]
          %v1131 = vld [vmem:[#allocation2 + $0x18] sm:$0xff]
          %v1132 = vld [vmem:[#allocation2 + $0x20] sm:$0xff]
          %v1133 = vld [vmem:[#allocation2 + $0x28] sm:$0xff]
          %v1134 = vld [vmem:[#allocation2 + $0x30] sm:$0xff]
          %v1135 = vld [vmem:[#allocation2 + $0x38] sm:$0xff]
          %v1136 = vld [vmem:[#allocation2 + $0x40] sm:$0xff]
          %v1137 = vld [vmem:[#allocation2 + $0x48] sm:$0xff]
          %v1138 = vld [vmem:[#allocation2 + $0x50] sm:$0xff]
          %v1139 = vld [vmem:[#allocation2 + $0x58] sm:$0xff]
          %v1140 = vld [vmem:[#allocation2 + $0x60] sm:$0xff]
          %v1141 = vld [vmem:[#allocation2 + $0x68] sm:$0xff]
          %v1142 = vld [vmem:[#allocation2 + $0x70] sm:$0xff]
          %v1143 = vld [vmem:[#allocation2 + $0x78] sm:$0xff]
          %v1144 = vld [vmem:[%s4] sm:$0x1]
          %v1146 = vperm.slane %v1144, 0
          %v1148 = vadd.f32 %v1128, %v1146
          %v1149 = vadd.f32 %v1129, %v1146
          %v1150 = vadd.f32 %v1130, %v1146
          %v1151 = vadd.f32 %v1131, %v1146
          %v1152 = vadd.f32 %v1132, %v1146
          %v1153 = vadd.f32 %v1133, %v1146
          %v1154 = vadd.f32 %v1134, %v1146
          %v1155 = vadd.f32 %v1135, %v1146
          %v1156 = vadd.f32 %v1136, %v1146
          %v1157 = vadd.f32 %v1137, %v1146
          %v1158 = vadd.f32 %v1138, %v1146
          %v1159 = vadd.f32 %v1139, %v1146
          %v1160 = vadd.f32 %v1140, %v1146
          %v1161 = vadd.f32 %v1141, %v1146
          %v1162 = vadd.f32 %v1142, %v1146
          %v1163 = vadd.f32 %v1143, %v1146
          %1164 = vst [vmem:[%s357] sm:$0xff] %v1148
          %1165 = vst [vmem:[%s357 + $0x8] sm:$0xff] %v1149
          %1166 = vst [vmem:[%s357 + $0x10] sm:$0xff] %v1150
          %1167 = vst [vmem:[%s357 + $0x18] sm:$0xff] %v1151
          %1168 = vst [vmem:[%s357 + $0x20] sm:$0xff] %v1152
          %1169 = vst [vmem:[%s357 + $0x28] sm:$0xff] %v1153
          %1170 = vst [vmem:[%s357 + $0x30] sm:$0xff] %v1154
          %1171 = vst [vmem:[%s357 + $0x38] sm:$0xff] %v1155
          %1172 = vst [vmem:[%s357 + $0x40] sm:$0xff] %v1156
          %1173 = vst [vmem:[%s357 + $0x48] sm:$0xff] %v1157
          %1174 = vst [vmem:[%s357 + $0x50] sm:$0xff] %v1158
          %1175 = vst [vmem:[%s357 + $0x58] sm:$0xff] %v1159
          %1176 = vst [vmem:[%s357 + $0x60] sm:$0xff] %v1160
          %1177 = vst [vmem:[%s357 + $0x68] sm:$0xff] %v1161
          %1178 = vst [vmem:[%s357 + $0x70] sm:$0xff] %v1162
          %1179 = vst [vmem:[%s357 + $0x78] sm:$0xff] %v1163
        $region64: #{tpu_custom_call.1} parent=39 // pred_fallthru
          _
        %s1180 = sand.u32 %s175, 1
        %s1181 = scalar_lea.sflag [#allocation5], %s1180
        %s1182 = sand.u32 %s175, 1
        %s1183 = smul.addr %s1182, 128
        %s1184 = scalar_lea.vmem [#allocation11], %s1183
        // Predicated region
        $region65: #{tpu_custom_call.1} parent=39 // pred_check
          %p1185 = pneg %p185
        $region66: #{tpu_custom_call.1} parent=39 // pred_check_branch
          %1187 = sbr.rel (%p1185) target = $region68
        $region67: #{tpu_custom_call.1} parent=39 // pred_region
          %s1188 = smul.u32 16, %s30
          %1190 = vsyncadd %s1181, 0
          %s1191 = smul.addr %s1188, 8
          %s1192 = scalar_lea.hbm %s5, %s1191
          %s1193 = sshll.u32 %s1184, 4
          %s1194 = int_to_ptr.vmem [resolvable:$true] %s1193
          %s1195 = sshll.u32 %s1192, 4
          %s1196 = int_to_ptr.hbm [resolvable:$true] %s1195
          %1201 = dma.vmem_to_hbm [thread:$0]  %s1194, 2048, %s1196, %s1181, 128, 128, 8
        $region68: #{tpu_custom_call.1} parent=39 // pred_fallthru
          _
      $region40: #{tpu_custom_call.1} parent=5 // pred_fallthru
        _
      %p1202 = scmp.le.s32.totalorder 2, %s21
      // Predicated region
      $region69: #{tpu_custom_call.1} parent=5 // pred_check
        %p1203 = pneg %p1202
      $region70: #{tpu_custom_call.1} parent=5 // pred_check_branch
        %1205 = sbr.rel (%p1203) target = $region72
      $region71: #{tpu_custom_call.1} parent=5 // pred_region
        %s1206 = ssub.s32 %s21, 2
        // Predicated region
        $region73: #{tpu_custom_call.1} parent=71 // pred_check
          %p1207 = pneg %p191
        $region74: #{tpu_custom_call.1} parent=71 // pred_check_branch
          %1209 = sbr.rel (%p1207) target = $region76
        $region75: #{tpu_custom_call.1} parent=71 // pred_region
          %s1210 = sand.u32 %s176, 1
          %s1211 = scalar_lea.sflag [#allocation5], %s1210
          %s1212 = sand.u32 %s176, 1
          %s1213 = smul.addr %s1212, 128
          %s1214 = scalar_lea.vmem [#allocation11], %s1213
          %1216 = dma.done %s1211, 2048
        $region76: #{tpu_custom_call.1} parent=71 // pred_fallthru
          _
      $region72: #{tpu_custom_call.1} parent=5 // pred_fallthru
        _
    $region6: #{tpu_custom_call.1} parent=1 // loop_footer
      %s25 = sadd.s32 1, %s21
    $region7: #{tpu_custom_call.1} parent=1 // loop_footer_branch
      %20 = sbr.rel target = $region3
    $region8: #{tpu_custom_call.1} parent=1 // loop_exit
      _
    %1217 = vsyncpa [#allocation4], 1
    %s1218 = scalar_lea.sflag [#allocation4], 1
    %1219 = vsyncpa %s1218, 1
    %1220 = vsyncpa [#allocation7], 1
    %s1221 = scalar_lea.sflag [#allocation7], 1
    %1222 = vsyncpa %s1221, 1
    %1223 = vsyncpa [#allocation10], 1
    %1224 = vsyncpa [#allocation5], 1
    %s1225 = scalar_lea.sflag [#allocation5], 1
    %1226 = vsyncpa %s1225, 1

</llo_original>
